<compile_context>
chip_gen: v7x
topology: tpu7x:2x2x1
jax: 0.10.0
libtpu: 0.0.40
codegen_flags: <defaults>
</compile_context>

<pallas_src>
import functools

import jax
import jax.numpy as jnp
from jax import lax
from jax.experimental import pallas as pl
from jax.experimental.pallas import tpu as pltpu


def _round_up(v, m):
    return ((v + m - 1) // m) * m


def _largest_divisor_tile(total, target, align):
    """Largest multiple of `align` that divides `total` and is <= target (or None)."""
    t = min(target, total)
    t -= t % align
    while t >= align:
        if total % t == 0:
            return t
        t -= align
    return None


# ---------------------------------------------------------------------------
# Kernel 1: tiled 1x1 conv (== matmul over channels) + bias + ReLU
# ---------------------------------------------------------------------------
def _conv1x1_bias_relu_kernel(x_ref, w_ref, b_ref, o_ref):
    # x_ref: (TM, K) bf16   w_ref: (K, C) bf16   b_ref: (1, C) f32   o_ref: (TM, C)
    acc = jnp.dot(x_ref[...], w_ref[...], preferred_element_type=jnp.float32)
    acc = jnp.maximum(acc + b_ref[...], 0.0)
    o_ref[...] = acc.astype(o_ref.dtype)


def conv1x1_bias_relu(x_mat, w_mat, b_vec, *, block_m=1024, out_dtype=jnp.bfloat16):
    """x_mat: (M, K), w_mat: (K, C), b_vec: (C,)  ->  relu(x @ w + b): (M, C)."""
    m, k = x_mat.shape
    c = w_mat.shape[1]

    tm = _largest_divisor_tile(m, block_m, 8)
    m_pad = m
    if tm is None:
        # Rare fallback (M has no multiple-of-8 divisor): pad M and crop afterwards.
        tm = max(8, min(_round_up(block_m, 8), _round_up(m, 8)))
        m_pad = _round_up(m, tm)
        x_mat = jnp.pad(x_mat, ((0, m_pad - m), (0, 0)))

    out = pl.pallas_call(
        _conv1x1_bias_relu_kernel,
        out_shape=jax.ShapeDtypeStruct((m_pad, c), out_dtype),
        grid=(m_pad // tm,),
        in_specs=[
            pl.BlockSpec((tm, k), lambda i: (i, 0)),    # pipelined activation tiles
            pl.BlockSpec((k, c), lambda i: (0, 0)),     # weights stay resident
            pl.BlockSpec((1, c), lambda i: (0, 0)),     # bias stays resident
        ],
        out_specs=pl.BlockSpec((tm, c), lambda i: (i, 0)),
        compiler_params=pltpu.CompilerParams(
            dimension_semantics=("parallel",),
            vmem_limit_bytes=48 * 1024 * 1024),
        cost_estimate=pl.CostEstimate(
            flops=2 * m_pad * k * c,
            transcendentals=0,
            bytes_accessed=2 * (m_pad * k + k * c + m_pad * c) + 4 * c),
    )(x_mat, w_mat, b_vec.reshape(1, c).astype(jnp.float32))
    return out if m_pad == m else out[:m]


# ---------------------------------------------------------------------------
# Kernel 2: spatially tiled 3x3 conv + folded BN + ReLU + SE scale + residual add
# ---------------------------------------------------------------------------
def _conv3x3_fused_kernel(xm_ref, halo_ref, w_ref, scale_ref, shift_ref,
                          se_ref, yup_ref, o_ref, win_ref, *, h_blk, wp8, w_out):
    # xm_ref:    (1, h_blk, wp8, Cin)  bf16  main rows of the zero-padded image
    # halo_ref:  (1, 2, wp8, Cin)      bf16  two bottom-halo rows for this block
    # w_ref:     (9, Cin, Cout)        bf16  3x3 taps, tap t = i*3 + j
    # scale/shift: (1, Cout)           f32   folded BatchNorm (inference)
    # se_ref:    (1, 1, Cout)          f32   per-image sigmoid channel attention
    # yup_ref:   (1, h_blk, W, Cout)   bf16  PixelShuffle branch, fused residual add
    # o_ref:     (1, h_blk, W, Cout)
    # win_ref:   ((h_blk + 3) * wp8, Cin) bf16 VMEM scratch (contiguous halo window)
    cin = xm_ref.shape[-1]
    cout = o_ref.shape[-1]
    n_rows = h_blk * wp8

    # Assemble the (h_blk + 2)-row halo window contiguously in VMEM.  Leading-dim
    # stores only; wp8 % 16 == 0 keeps the bf16 reshapes layout-preserving.
    win_ref[0:n_rows, :] = xm_ref[0].reshape(n_rows, cin)
    win_ref[n_rows:n_rows + 2 * wp8, :] = halo_ref[0].reshape(2 * wp8, cin)
    win_ref[n_rows + 2 * wp8:(h_blk + 3) * wp8, :] = jnp.zeros((wp8, cin),
                                                               win_ref.dtype)

    span = n_rows + 2 * wp8
    acc = jnp.zeros((n_rows, cout), jnp.float32)
    for j in range(3):                            # horizontal taps: one sublane shift each
        shifted = win_ref[j:j + span, :]
        for i in range(3):                        # vertical taps: aligned (wp8 % 8 == 0)
            tap = shifted[i * wp8:i * wp8 + n_rows, :]
            acc = acc + jnp.dot(tap, w_ref[i * 3 + j],
                                preferred_element_type=jnp.float32)

    acc = acc * scale_ref[...] + shift_ref[...]          # folded BN (inference)
    acc = jnp.maximum(acc, 0.0)                          # ReLU
    acc = acc * se_ref[0]                                # SE channel attention
    acc = acc.reshape(h_blk, wp8, cout)[:, :w_out, :]    # crop padded columns in-kernel
    o_ref[0] = acc + yup_ref[0].astype(jnp.float32)      # fused `yup + z`


def conv3x3_bn_relu_scale_add(x_nhwc, w9, bn_scale, bn_shift, se, yup, *,
                              block_h=8, out_dtype=jnp.float32):
    """x_nhwc: (N,H,W,Cin), w9: (9,Cin,Cout) bf16, bn_*: (Cout,), se: (N,Cout),
    yup: (N,H,W,Cout) bf16  ->  yup + se * relu(BN(conv3x3(x))): (N,H,W,Cout)."""
    n, h, w, cin = x_nhwc.shape
    cout = w9.shape[-1]

    h_blk = _largest_divisor_tile(h, block_h, 1)
    if h_blk < min(8, block_h, h) and h <= 8 * block_h:
        # Awkward (e.g. prime) H: one block per image still fits at this budget.
        h_blk = h
    nb = h // h_blk

    wp8 = _round_up(w + 2, 16)     # conv padding + width alignment (bf16 sublane pack)
    xp = jnp.pad(x_nhwc, ((0, 0), (1, 1), (1, wp8 - w - 1), (0, 0)))
    xp = xp.astype(jnp.bfloat16)                                   # (N, H+2, wp8, Cin)

    # Bottom halo: 2 rows per row block, gathered once in the wrapper (~2/h_blk of x).
    rows = jnp.arange(nb) * h_blk + h_blk
    halo = xp[:, rows[:, None] + jnp.arange(2)[None, :]]           # (N, nb, 2, wp8, Cin)
    halo = halo.reshape(n, nb * 2, wp8, cin)

    kernel = functools.partial(_conv3x3_fused_kernel, h_blk=h_blk, wp8=wp8, w_out=w)
    win_rows = (h_blk + 3) * wp8
    return pl.pallas_call(
        kernel,
        out_shape=jax.ShapeDtypeStruct((n, h, w, cout), out_dtype),
        grid=(n, nb),
        in_specs=[
            pl.BlockSpec((1, h_blk, wp8, cin), lambda b, r: (b, r, 0, 0)),
            pl.BlockSpec((1, 2, wp8, cin), lambda b, r: (b, r, 0, 0)),
            pl.BlockSpec((9, cin, cout), lambda b, r: (0, 0, 0)),   # resident taps
            pl.BlockSpec((1, cout), lambda b, r: (0, 0)),           # resident BN scale
            pl.BlockSpec((1, cout), lambda b, r: (0, 0)),           # resident BN shift
            pl.BlockSpec((1, 1, cout), lambda b, r: (b, 0, 0)),     # per-image SE
            pl.BlockSpec((1, h_blk, w, cout), lambda b, r: (b, r, 0, 0)),  # yup tile
        ],
        out_specs=pl.BlockSpec((1, h_blk, w, cout), lambda b, r: (b, r, 0, 0)),
        scratch_shapes=[pltpu.VMEM((win_rows, cin), jnp.bfloat16)],
        compiler_params=pltpu.CompilerParams(
            dimension_semantics=("parallel", "parallel"),
            vmem_limit_bytes=48 * 1024 * 1024),
        cost_estimate=pl.CostEstimate(
            flops=2 * n * h * wp8 * 9 * cin * cout,
            transcendentals=0,
            bytes_accessed=(2 * (n * (h + 2) * wp8 * cin + 9 * cin * cout
                                 + n * h * w * cout)
                            + 4 * (2 * cout + n * cout + n * h * w * cout))),
    )(xp, halo, w9, bn_scale.reshape(1, cout), bn_shift.reshape(1, cout),
      se.reshape(n, 1, cout), yup)


# ---------------------------------------------------------------------------
# Full SFUM forward (inference mode)
# ---------------------------------------------------------------------------
def sfum_forward(x, y, p, *, block_m=1024, block_h=8):
    """x: (N, in_ch, H, W), y: (N, out_ch, H/2, W/2)  ->  (N, out_ch, H, W)."""
    eps = 1e-5
    n, cin, h, w = x.shape
    _, cout, h2, w2 = y.shape

    # ---- conv3 branch: 1x1 conv (cout -> 4*cout) + bias + ReLU, then PixelShuffle(2).
    # Pre-permute output columns to (i, j, c) order so the shuffle keeps Cout on lanes.
    perm = jnp.arange(4 * cout).reshape(cout, 2, 2).transpose(1, 2, 0).reshape(-1)
    w3_mat = p["w3"].reshape(4 * cout, cout).T[:, perm].astype(jnp.bfloat16)
    b3 = p["b3"][perm]
    y_nhwc = jnp.transpose(y, (0, 2, 3, 1))                       # (N, H2, W2, Cout)
    y_mat = y_nhwc.reshape(n * h2 * w2, cout).astype(jnp.bfloat16)
    yup_mat = conv1x1_bias_relu(y_mat, w3_mat, b3, block_m=block_m)
    yup = yup_mat.reshape(n, h2, w2, 2, 2, cout)                  # dims (i, j, c)
    yup = yup.transpose(0, 1, 3, 2, 4, 5).reshape(n, 2 * h2, 2 * w2, cout)

    # ---- conv1 branch (SE): avg pool + 1x1 conv + BN + ReLU + Sigmoid (tiny; plain JAX)
    pooled = jnp.mean(y, axis=(2, 3))                             # (N, Cout) f32
    se = jnp.dot(pooled, p["w1"].reshape(cout, cout).T)
    s1 = p["g1"] * lax.rsqrt(p["v1"] + eps)
    se = se * s1 + (p["b1"] - p["m1"] * s1)
    se = jax.nn.sigmoid(jnp.maximum(se, 0.0))

    # ---- conv2 branch: 3x3 conv + folded BN + ReLU, fused with the SE multiply and
    #      the final `yup + z` residual add inside kernel 2.
    x_nhwc = jnp.transpose(x, (0, 2, 3, 1))                       # (N, H, W, Cin)
    w9 = p["w2"].transpose(2, 3, 1, 0).reshape(9, cin, cout).astype(jnp.bfloat16)
    s2 = p["g2"] * lax.rsqrt(p["v2"] + eps)
    shift2 = p["b2"] - p["m2"] * s2
    out = conv3x3_bn_relu_scale_add(x_nhwc, w9, s2, shift2, se, yup, block_h=block_h)

    # TODO(synk): fuse this NHWC->NCHW transpose into the kernel-2 epilogue (or run
    # the surrounding network channels-last) to drop one more HBM pass.
    return jnp.transpose(out, (0, 3, 1, 2))


# ---------------------------------------------------------------------------
# Pure-JAX reference of the same (inference-mode) forward pass
# ---------------------------------------------------------------------------
def reference(x, y, p):
    eps = 1e-5
    dn = ("NCHW", "OIHW", "NCHW")
    n = x.shape[0]
    cout = p["w2"].shape[0]

    # conv3 branch
    y3 = lax.conv_general_dilated(y, p["w3"], (1, 1), "VALID", dimension_numbers=dn)
    y3 = jnp.maximum(y3 + p["b3"][None, :, None, None], 0.0)
    h2, w2 = y3.shape[2], y3.shape[3]
    y_up = y3.reshape(n, cout, 2, 2, h2, w2).transpose(0, 1, 4, 2, 5, 3)
    y_up = y_up.reshape(n, cout, 2 * h2, 2 * w2)

    # conv2 branch
    x2 = lax.conv_general_dilated(x, p["w2"], (1, 1), [(1, 1), (1, 1)],
                                  dimension_numbers=dn)
    x2 = (x2 - p["m2"][None, :, None, None]) * lax.rsqrt(p["v2"] + eps)[None, :, None, None]
    x2 = x2 * p["g2"][None, :, None, None] + p["b2"][None, :, None, None]
    x2 = jnp.maximum(x2, 0.0)

    # conv1 (SE) branch
    pooled = jnp.mean(y, axis=(2, 3))
    se = jnp.dot(pooled, p["w1"].reshape(cout, cout).T)
    se = (se - p["m1"]) * lax.rsqrt(p["v1"] + eps) * p["g1"] + p["b1"]
    se = jax.nn.sigmoid(jnp.maximum(se, 0.0))

    z = x2 * se[:, :, None, None]
    return y_up + z


if __name__ == "__main__":
    key = jax.random.PRNGKey(0)
    ks = jax.random.split(key, 14)

    N, IN_CH, OUT_CH = 2, 4, 8
    H, W = 16, 16
    H2, W2 = H // 2, W // 2

    x = jax.random.normal(ks[0], (N, IN_CH, H, W), dtype=jnp.float32)
    y = jax.random.normal(ks[1], (N, OUT_CH, H2, W2), dtype=jnp.float32)

    params = {
        # conv2: 3x3, no bias (BN follows) + BN running stats / affine
        "w2": jax.random.normal(ks[2], (OUT_CH, IN_CH, 3, 3), jnp.float32) * 0.1,
        "g2": 1.0 + 0.1 * jax.random.normal(ks[3], (OUT_CH,), jnp.float32),
        "b2": 0.1 * jax.random.normal(ks[4], (OUT_CH,), jnp.float32),
        "m2": 0.1 * jax.random.normal(ks[5], (OUT_CH,), jnp.float32),
        "v2": jax.random.uniform(ks[6], (OUT_CH,), jnp.float32, 0.5, 1.5),
        # conv3: 1x1 with bias, no norm
        "w3": jax.random.normal(ks[7], (4 * OUT_CH, OUT_CH, 1, 1), jnp.float32) * 0.1,
        "b3": 0.1 * jax.random.normal(ks[8], (4 * OUT_CH,), jnp.float32),
        # conv1 (SE): 1x1, no bias (BN follows) + BN running stats / affine
        "w1": jax.random.normal(ks[9], (OUT_CH, OUT_CH, 1, 1), jnp.float32) * 0.1,
        "g1": 1.0 + 0.1 * jax.random.normal(ks[10], (OUT_CH,), jnp.float32),
        "b1": 0.1 * jax.random.normal(ks[11], (OUT_CH,), jnp.float32),
        "m1": 0.1 * jax.random.normal(ks[12], (OUT_CH,), jnp.float32),
        "v1": jax.random.uniform(ks[13], (OUT_CH,), jnp.float32, 0.5, 1.5),
    }

    # block_m=64 -> 2-step grid in kernel 1 (M = 128 pixel rows); block_h=8 -> (N, 2)
    # grid in kernel 2, exercising both an interior halo and the bottom-edge halo.
    out = sfum_forward(x, y, params, block_m=64, block_h=8)
    out = jax.block_until_ready(out)

    ref = reference(x, y, params)
    assert out.shape == (N, OUT_CH, H, W), out.shape
    # Tolerance sized for deliberate bf16 MXU operands (f32 accumulation); structural
    # errors would be orders of magnitude larger.
    max_err = float(jnp.max(jnp.abs(out - ref)))
    assert jnp.allclose(out, ref, atol=2e-2, rtol=2e-2), max_err

    print("KERNEL_OK")
</pallas_src>

<mosaic_0001>
module attributes {stable_mosaic.version = 11 : i64} {
  func.func @_conv1x1_bias_relu_kernel(%arg0: i32, %arg1: memref<64x8xbf16, #tpu.memory_space<vmem>>, %arg2: memref<8x32xbf16, #tpu.memory_space<vmem>>, %arg3: memref<1x32xf32, #tpu.memory_space<vmem>>, %arg4: memref<64x32xbf16, #tpu.memory_space<vmem>>) attributes {dimension_semantics = [#tpu.dimension_semantics<parallel>], iteration_bounds = array<i64: 2>, scalar_prefetch = 0 : i64, scratch_operands = 0 : i64, tpu.core_type = #tpu.core_type<tc>, window_params = [{transform_indices = @transform_0, window_bounds = array<i64: 64, 8>}, {pipeline_mode = #tpu.pipeline_mode<synchronous>, transform_indices = @transform_1, window_bounds = array<i64: 8, 32>}, {pipeline_mode = #tpu.pipeline_mode<synchronous>, transform_indices = @transform_2, window_bounds = array<i64: 1, 32>}, {transform_indices = @transform_3, window_bounds = array<i64: 64, 32>}]} {
    %c0 = arith.constant 0 : index
    %c0_0 = arith.constant 0 : index
    %0 = vector.load %arg1[%c0, %c0_0] : memref<64x8xbf16, #tpu.memory_space<vmem>>, vector<64x8xbf16>
    %c0_1 = arith.constant 0 : index
    %c0_2 = arith.constant 0 : index
    %1 = vector.load %arg2[%c0_1, %c0_2] : memref<8x32xbf16, #tpu.memory_space<vmem>>, vector<8x32xbf16>
    %cst = arith.constant dense<0.000000e+00> : vector<64x32xf32>
    %2 = tpu.matmul %0, %1, %cst {dimension_numbers = #tpu.dot_dimension_numbers<[1], [0], [0], [1], [0, 0, 1, 1], [], []>} : vector<64x8xbf16>, vector<8x32xbf16>, vector<64x32xf32> -> vector<64x32xf32>
    %c0_3 = arith.constant 0 : index
    %c0_4 = arith.constant 0 : index
    %3 = vector.load %arg3[%c0_3, %c0_4] : memref<1x32xf32, #tpu.memory_space<vmem>>, vector<1x32xf32>
    %4 = vector.broadcast %3 : vector<1x32xf32> to vector<64x32xf32>
    %5 = arith.addf %2, %4 : vector<64x32xf32>
    %cst_5 = arith.constant 0.000000e+00 : f32
    %6 = vector.broadcast %cst_5 : f32 to vector<64x32xf32>
    %7 = arith.maximumf %5, %6 : vector<64x32xf32>
    %8 = arith.truncf %7 : vector<64x32xf32> to vector<64x32xbf16>
    %c0_6 = arith.constant 0 : index
    %c0_7 = arith.constant 0 : index
    %9 = vector.load %arg4[%c0_6, %c0_7] : memref<64x32xbf16, #tpu.memory_space<vmem>>, vector<64x32xbf16>
    tpu.vector_store %arg4[%c0_6, %c0_7], %8 {strides = array<i32>} : memref<64x32xbf16, #tpu.memory_space<vmem>>, vector<64x32xbf16>,
    return
  }
  func.func @transform_0(%arg0: i32) -> (i32, i32) {
    %c0_i32 = arith.constant 0 : i32
    %c0_i32_0 = arith.constant 0 : i32
    return %arg0, %c0_i32 : i32, i32
  }
  func.func @transform_1(%arg0: i32) -> (i32, i32) {
    %c0_i32 = arith.constant 0 : i32
    %c0_i32_0 = arith.constant 0 : i32
    %c0_i32_1 = arith.constant 0 : i32
    return %c0_i32, %c0_i32_0 : i32, i32
  }
  func.func @transform_2(%arg0: i32) -> (i32, i32) {
    %c0_i32 = arith.constant 0 : i32
    %c0_i32_0 = arith.constant 0 : i32
    %c0_i32_1 = arith.constant 0 : i32
    return %c0_i32, %c0_i32_0 : i32, i32
  }
  func.func @transform_3(%arg0: i32) -> (i32, i32) {
    %c0_i32 = arith.constant 0 : i32
    %c0_i32_0 = arith.constant 0 : i32
    return %arg0, %c0_i32 : i32, i32
  }
}

</mosaic_0001>

<llo_original>
// kernel: tpu_custom_call.1
$region0: #{tpu_custom_call.1}
  #allocation0 [shape = 'u32[]', space=smem, size = 0x4, offset = 0x4, fixed_abs, tag = 'smem constant byte address 0x4 - core index']
  #allocation1 [shape = 'u32[144,128]{1,0:T(1,128)}', space=vmem, size = 0x12000, scoped, tag = 'internal scratch']
  %s0 = inlined_call_operand.vmem [shape: bf16[128,8], index: 0, kind: input, shape index: {}]
  %s1 = inlined_call_operand.vmem [shape: bf16[8,32], index: 1, kind: input, shape index: {}]
  %s2 = inlined_call_operand.vmem [shape: f32[1,32], index: 2, kind: input, shape index: {}]
  %s3 = inlined_call_operand.vmem [shape: bf16[128,32], index: 3, kind: output, shape index: {}]
  %s4 = sld [smem:[#allocation0]]
  $region45: #{tpu_custom_call.1} parent=0
    _
  %s6 = ssub.s32 1, %s4
  %s7 = scalar_select 0, %s6, %s4
  loop: start=0, step=1, limit=4
  $region2: #{tpu_custom_call.1} parent=0 // loop_pre_header
    _
  $region3: #{tpu_custom_call.1} parent=0 // loop_header
    %s9 = sphi 0, %s13
    %p10 = scmp.ge.s32.totalorder %s9, 4
    %s19 = sphi 0, %s21
    %s22 = sphi 0, %s19
    %s23 = sphi 0, %s22
    %s39 = sphi 0, %s23
    %s43 = sphi 0, %s43
    %s45 = sphi 0, %s43
    %s46 = sphi 0, %s45
    %s60 = sphi 0, %s46
    %s64 = sphi 0, %s64
    %s66 = sphi 0, %s64
    %s67 = sphi 0, %s66
    %s81 = sphi 0, %s67
    %s87 = sphi 0, %s89
    %s90 = sphi 0, %s87
    %s91 = sphi 0, %s90
    %s107 = sphi 0, %s91
  $region4: #{tpu_custom_call.1} parent=0 // loop_header_branch
    %12 = sbr.rel (%p10) target = $region8
  $region5: #{tpu_custom_call.1} parent=0 // loop_body
    %s14 = ssub.s32 %s9, 1
    %s15 = ssub.s32 %s9, 2
    %s16 = sadd.s32 %s9, 1
    %s17 = ssub.s32 %s9, %s16
    %p18 = scmp.eq.s32.totalorder %s17, 0
    %s20 = sadd.s32 %s19, 1
    %s21 = scalar_select %p18, %s19, %s20
    %p24 = pneg %p18
    %p25 = scmp.eq.s32.totalorder %s9, 1
    %p26 = por %p24, %p25
    %p27 = scmp.ne.s32.totalorder %s19, %s22
    %p28 = scmp.eq.s32.totalorder %s9, 0
    %p29 = por %p27, %p28
    %p30 = scmp.ne.s32.totalorder %s19, %s22
    %p31 = scmp.eq.s32.totalorder %s14, 1
    %p32 = por %p30, %p31
    %p33 = scmp.ne.s32.totalorder %s22, %s23
    %p34 = scmp.eq.s32.totalorder %s14, 0
    %p35 = por %p33, %p34
    %p36 = scmp.ne.s32.totalorder %s22, %s23
    %p37 = scmp.eq.s32.totalorder %s15, 1
    %p38 = por %p36, %p37
    %p40 = scmp.ne.s32.totalorder %s23, %s39
    %p41 = scmp.eq.s32.totalorder %s15, 0
    %p42 = por %p40, %p41
    %s44 = sadd.s32 %s43, 1
    %p47 = scmp.eq.s32.totalorder %s9, 1
    %p48 = scmp.ne.s32.totalorder %s43, %s45
    %p49 = scmp.eq.s32.totalorder %s9, 0
    %p50 = por %p48, %p49
    %p51 = scmp.ne.s32.totalorder %s43, %s45
    %p52 = scmp.eq.s32.totalorder %s14, 1
    %p53 = por %p51, %p52
    %p54 = scmp.ne.s32.totalorder %s45, %s46
    %p55 = scmp.eq.s32.totalorder %s14, 0
    %p56 = por %p54, %p55
    %p57 = scmp.ne.s32.totalorder %s45, %s46
    %p58 = scmp.eq.s32.totalorder %s15, 1
    %p59 = por %p57, %p58
    %p61 = scmp.ne.s32.totalorder %s46, %s60
    %p62 = scmp.eq.s32.totalorder %s15, 0
    %p63 = por %p61, %p62
    %s65 = sadd.s32 %s64, 1
    %p68 = scmp.eq.s32.totalorder %s9, 1
    %p69 = scmp.ne.s32.totalorder %s64, %s66
    %p70 = scmp.eq.s32.totalorder %s9, 0
    %p71 = por %p69, %p70
    %p72 = scmp.ne.s32.totalorder %s64, %s66
    %p73 = scmp.eq.s32.totalorder %s14, 1
    %p74 = por %p72, %p73
    %p75 = scmp.ne.s32.totalorder %s66, %s67
    %p76 = scmp.eq.s32.totalorder %s14, 0
    %p77 = por %p75, %p76
    %p78 = scmp.ne.s32.totalorder %s66, %s67
    %p79 = scmp.eq.s32.totalorder %s15, 1
    %p80 = por %p78, %p79
    %p82 = scmp.ne.s32.totalorder %s67, %s81
    %p83 = scmp.eq.s32.totalorder %s15, 0
    %p84 = por %p82, %p83
    %s85 = ssub.s32 %s9, %s16
    %p86 = scmp.eq.s32.totalorder %s85, 0
    %s88 = sadd.s32 %s87, 1
    %s89 = scalar_select %p86, %s87, %s88
    %p92 = pneg %p86
    %p93 = scmp.eq.s32.totalorder %s9, 1
    %p94 = por %p92, %p93
    %p95 = scmp.ne.s32.totalorder %s87, %s90
    %p96 = scmp.eq.s32.totalorder %s9, 0
    %p97 = por %p95, %p96
    %p98 = scmp.ne.s32.totalorder %s87, %s90
    %p99 = scmp.eq.s32.totalorder %s14, 1
    %p100 = por %p98, %p99
    %p101 = scmp.ne.s32.totalorder %s90, %s91
    %p102 = scmp.eq.s32.totalorder %s14, 0
    %p103 = por %p101, %p102
    %p104 = scmp.ne.s32.totalorder %s90, %s91
    %p105 = scmp.eq.s32.totalorder %s15, 1
    %p106 = por %p104, %p105
    %p108 = scmp.ne.s32.totalorder %s91, %s107
    %p109 = scmp.eq.s32.totalorder %s15, 0
    %p110 = por %p108, %p109
    %p111 = scmp.le.s32.totalorder 1, %s9
    %p112 = scmp.lt.s32.totalorder %s9, 3
    %p113 = pnand %p111, %p112
    %p114 = pneg %p113
    // Predicated region
    $region9: #{tpu_custom_call.1} parent=5 // pred_check
      _
    $region10: #{tpu_custom_call.1} parent=5 // pred_check_branch
      %116 = sbr.rel (%p113) target = $region12
    $region11: #{tpu_custom_call.1} parent=5 // pred_region
      %s117 = ssub.s32 %s9, 1
      // Predicated region
      $region13: #{tpu_custom_call.1} parent=11 // pred_check
        %p118 = pneg %p56
      $region14: #{tpu_custom_call.1} parent=11 // pred_check_branch
        %120 = sbr.rel (%p118) target = $region16
      $region15: #{tpu_custom_call.1} parent=11 // pred_region
        _
      $region16: #{tpu_custom_call.1} parent=11 // pred_fallthru
        _
      // Predicated region
      $region17: #{tpu_custom_call.1} parent=11 // pred_check
        %p121 = pneg %p77
      $region18: #{tpu_custom_call.1} parent=11 // pred_check_branch
        %123 = sbr.rel (%p121) target = $region20
      $region19: #{tpu_custom_call.1} parent=11 // pred_region
        _
      $region20: #{tpu_custom_call.1} parent=11 // pred_fallthru
        _
    $region12: #{tpu_custom_call.1} parent=5 // pred_fallthru
      _
    %p124 = scmp.lt.s32.totalorder %s9, 2
    // Predicated region
    $region21: #{tpu_custom_call.1} parent=5 // pred_check
      %p125 = pneg %p124
    $region22: #{tpu_custom_call.1} parent=5 // pred_check_branch
      %127 = sbr.rel (%p125) target = $region24
    $region23: #{tpu_custom_call.1} parent=5 // pred_region
      // Predicated region
      $region25: #{tpu_custom_call.1} parent=23 // pred_check
        %p128 = pneg %p29
      $region26: #{tpu_custom_call.1} parent=23 // pred_check_branch
        %130 = sbr.rel (%p128) target = $region28
      $region27: #{tpu_custom_call.1} parent=23 // pred_region
        %s131 = smul.u32 8, %s9
        %p132 = scmp.lt.s32.totalorder %s131, 15
        %s133 = scalar_select %p132, %s131, 15
        %s134 = smul.addr %s133, 4
        %s135 = scalar_lea.vmem %s0, %s134
        %s136 = smul.u32 8, %s9
      $region28: #{tpu_custom_call.1} parent=23 // pred_fallthru
        _
    $region24: #{tpu_custom_call.1} parent=5 // pred_fallthru
      _
    %p137 = scmp.le.s32.totalorder 1, %s9
    %p138 = scmp.lt.s32.totalorder %s9, 3
    %p139 = pnand %p137, %p138
    %p140 = pneg %p139
    // Predicated region
    $region29: #{tpu_custom_call.1} parent=5 // pred_check
      _
    $region30: #{tpu_custom_call.1} parent=5 // pred_check_branch
      %142 = sbr.rel (%p139) target = $region32
    $region31: #{tpu_custom_call.1} parent=5 // pred_region
      %s143 = ssub.s32 %s9, 1
      %s144 = smul.u32 8, %s14
      %p145 = scmp.lt.s32.totalorder %s144, 15
      %s146 = scalar_select %p145, %s144, 15
      %s147 = smul.addr %s146, 4
      %s148 = scalar_lea.vmem %s0, %s147
      %p149 = pneg %p35
      %p150 = pneg %p32
      %p151 = pneg %p56
      %p152 = pneg %p53
      %p153 = pneg %p77
      %p154 = pneg %p74
      %p155 = pneg %p103
      %p156 = pneg %p100
      %s157 = smul.u32 8, %s14
      %p158 = scmp.lt.s32.totalorder %s157, 15
      %s159 = scalar_select %p158, %s157, 15
      %s160 = smul.addr %s159, 4
      %s161 = scalar_lea.vmem %s3, %s160
      %s162 = smul.u32 8, %s14
      %p163 = scmp.lt.s32.totalorder %s162, 15
      %s164 = scalar_select %p163, %s162, 15
      %s165 = smul.addr %s164, 4
      %s166 = scalar_lea.vmem %s0, %s165
      %s167 = smul.u32 8, %s14
      %s168 = smul.u32 8, %s14
      %p169 = scmp.lt.s32.totalorder %s168, 15
      %s170 = scalar_select %p169, %s168, 15
      %s171 = smul.addr %s170, 4
      %s172 = scalar_lea.vmem %s3, %s171
      %s173 = smul.u32 8, %s14
      %v175 = vld [vmem:[%s166] sm:$0xf]
      %v176 = vld [vmem:[%s166 + $0x4] sm:$0xf]
      %v177 = vld [vmem:[%s166 + $0x8] sm:$0xf]
      %v178 = vld [vmem:[%s166 + $0xc] sm:$0xf]
      %v179 = vld [vmem:[%s166 + $0x10] sm:$0xf]
      %v180 = vld [vmem:[%s166 + $0x14] sm:$0xf]
      %v181 = vld [vmem:[%s166 + $0x18] sm:$0xf]
      %v182 = vld [vmem:[%s166 + $0x1c] sm:$0xf]
      %v183 = vld [vmem:[%s1] sm:$0xf]
      %v184 = vld [vmem:[%s2] sm:$0x1]
      %v186 = vlaneseq
      %v187 = vshrl.u32 %v186, 7
      %v188 = vsub.s32 0, %v187
      %v189 = vrot.slane %v184, %v188
      %v199 = vunpack.c.l.b16 %v175
      %v200 = vunpack.c.l.b16 %v176
      %v201 = vunpack.c.l.b16 %v177
      %v202 = vunpack.c.l.b16 %v178
      %v203 = vunpack.c.l.b16 %v179
      %v204 = vunpack.c.l.b16 %v180
      %v205 = vunpack.c.l.b16 %v181
      %v206 = vunpack.c.l.b16 %v182
      %v207 = vpack.c.b16 %v200, %v199
      %v208 = vpack.c.b16 %v202, %v201
      %v209 = vpack.c.b16 %v204, %v203
      %v210 = vpack.c.b16 %v206, %v205
      %vm211 = vcmask 64512
      %v213 = vsel %vm211, %v207, 0
      %v216 = vsel %vm211, %v208, 0
      %v219 = vsel %vm211, %v209, 0
      %v222 = vsel %vm211, %v210, 0
      %vm224 = vcmask 1043456
      %v226 = vsel %vm224, %v183, 0
      %228 = vmatprep.subr.bf16.mxu0 0
      %229 = vmatpush1.bf16.msra.mxu0 %v226
      %230 = vmatprep.subr.bf16.mxu0 0
      %231 = vmatpush1.bf16.msra.mxu0 0
      %232 = vmatprep.subr.bf16.mxu0 0
      %233 = vmatpush1.bf16.msra.mxu0 0
      %234 = vmatprep.subr.bf16.mxu0 0
      %235 = vmatpush1.bf16.msra.mxu0 0
      %236 = vmatprep.subr.bf16.mxu0 0
      %237 = vmatpush1.bf16.msra.mxu0 0
      %238 = vmatprep.subr.bf16.mxu0 0
      %239 = vmatpush1.bf16.msra.mxu0 0
      %240 = vmatprep.subr.bf16.mxu0 0
      %241 = vmatpush1.bf16.msra.mxu0 0
      %242 = vmatprep.subr.bf16.mxu0 0
      %243 = vmatpush1.bf16.msra.mxu0 0
      %244 = vmatprep.subr.bf16.mxu0 0
      %245 = vmatpush1.bf16.msra.mxu0 0
      %246 = vmatprep.subr.bf16.mxu0 0
      %247 = vmatpush1.bf16.msra.mxu0 0
      %248 = vmatprep.subr.bf16.mxu0 0
      %249 = vmatpush1.bf16.msra.mxu0 0
      %250 = vmatprep.subr.bf16.mxu0 0
      %251 = vmatpush1.bf16.msra.mxu0 0
      %252 = vmatprep.subr.bf16.mxu0 0
      %253 = vmatpush1.bf16.msra.mxu0 0
      %254 = vmatprep.subr.bf16.mxu0 0
      %255 = vmatpush1.bf16.msra.mxu0 0
      %256 = vmatprep.subr.bf16.mxu0 0
      %257 = vmatpush1.bf16.msra.mxu0 0
      %258 = vmatprep.subr.bf16.mxu0 0
      %259 = vmatpush1.bf16.msra.mxu0 0
      %260 = vmatprep.mubr.bf16.mxu0 0
      %261 = vmatmul.mubr.bf16.gmra.mrb[0].mxu0 %v213
      %v262 = vpop.f32.mrb[0].mxu0
      %v263 = vadd.f32 %v189, %v262
      %v264 = vpop.f32.mrb[0].mxu0
      %v265 = vpop.f32.mrb[0].mxu0
      %v266 = vadd.f32 %v189, %v265
      %v267 = vpop.f32.mrb[0].mxu0
      %268 = vmatprep.mubr.bf16.mxu0 0
      %269 = vmatmul.mubr.bf16.gmra.mrb[0].mxu0 %v216
      %v270 = vpop.f32.mrb[0].mxu0
      %v271 = vadd.f32 %v189, %v270
      %v272 = vpop.f32.mrb[0].mxu0
      %v273 = vpop.f32.mrb[0].mxu0
      %v274 = vadd.f32 %v189, %v273
      %v275 = vpop.f32.mrb[0].mxu0
      %276 = vmatprep.mubr.bf16.mxu0 0
      %277 = vmatmul.mubr.bf16.gmra.mrb[0].mxu0 %v219
      %v278 = vpop.f32.mrb[0].mxu0
      %v279 = vadd.f32 %v189, %v278
      %v280 = vpop.f32.mrb[0].mxu0
      %v281 = vpop.f32.mrb[0].mxu0
      %v282 = vadd.f32 %v189, %v281
      %v283 = vpop.f32.mrb[0].mxu0
      %284 = vmatprep.mubr.bf16.mxu0 0
      %285 = vmatmul.mubr.bf16.gmra.mrb[0].mxu0 %v222
      %v286 = vpop.f32.mrb[0].mxu0
      %v287 = vadd.f32 %v189, %v286
      %v288 = vpop.f32.mrb[0].mxu0
      %v289 = vpop.f32.mrb[0].mxu0
      %v290 = vadd.f32 %v189, %v289
      %v291 = vpop.f32.mrb[0].mxu0
      %292 = vdwg.mxu0
      %v293 = vmax.f32 %v263, 0.0
      %v294 = vmax.f32 %v266, 0.0
      %v295 = vmax.f32 %v271, 0.0
      %v296 = vmax.f32 %v274, 0.0
      %v297 = vmax.f32 %v279, 0.0
      %v298 = vmax.f32 %v282, 0.0
      %v299 = vmax.f32 %v287, 0.0
      %v300 = vmax.f32 %v290, 0.0
      %v301 = vpack.c.bf16 %v294, %v293
      %v302 = vpack.c.bf16 %v296, %v295
      %v303 = vpack.c.bf16 %v298, %v297
      %v304 = vpack.c.bf16 %v300, %v299
      %v309 = vunpack.c.l.b16 %v301
      %v310 = vunpack.c.h.b16 %v301
      %v311 = vunpack.c.l.b16 %v302
      %v312 = vunpack.c.h.b16 %v302
      %v313 = vunpack.c.l.b16 %v303
      %v314 = vunpack.c.h.b16 %v303
      %v315 = vunpack.c.l.b16 %v304
      %v316 = vunpack.c.h.b16 %v304
      %v317 = vpack.c.b16 %v309, %v309
      %v318 = vpack.c.b16 %v310, %v310
      %v319 = vpack.c.b16 %v311, %v311
      %v320 = vpack.c.b16 %v312, %v312
      %v321 = vpack.c.b16 %v313, %v313
      %v322 = vpack.c.b16 %v314, %v314
      %v323 = vpack.c.b16 %v315, %v315
      %v324 = vpack.c.b16 %v316, %v316
      %vm333 = vcmask 257024
      %334 = vst.msk [vmem:[%s172] sm:$0xf] %vm333, %v317
      %335 = vst.msk [vmem:[%s172 + $0x4] sm:$0xf] %vm333, %v318
      %336 = vst.msk [vmem:[%s172 + $0x8] sm:$0xf] %vm333, %v319
      %337 = vst.msk [vmem:[%s172 + $0xc] sm:$0xf] %vm333, %v320
      %338 = vst.msk [vmem:[%s172 + $0x10] sm:$0xf] %vm333, %v321
      %339 = vst.msk [vmem:[%s172 + $0x14] sm:$0xf] %vm333, %v322
      %340 = vst.msk [vmem:[%s172 + $0x18] sm:$0xf] %vm333, %v323
      %341 = vst.msk [vmem:[%s172 + $0x1c] sm:$0xf] %vm333, %v324
      %s342 = smul.u32 8, %s14
      %p343 = scmp.lt.s32.totalorder %s342, 15
      %s344 = scalar_select %p343, %s342, 15
      %s345 = smul.addr %s344, 4
      %s346 = scalar_lea.vmem %s3, %s345
      // Predicated region
      $region33: #{tpu_custom_call.1} parent=31 // pred_check
        %p347 = pneg %p100
      $region34: #{tpu_custom_call.1} parent=31 // pred_check_branch
        %349 = sbr.rel (%p347) target = $region36
      $region35: #{tpu_custom_call.1} parent=31 // pred_region
        %s350 = smul.u32 8, %s14
      $region36: #{tpu_custom_call.1} parent=31 // pred_fallthru
        _
    $region32: #{tpu_custom_call.1} parent=5 // pred_fallthru
      _
    %p351 = scmp.le.s32.totalorder 2, %s9
    // Predicated region
    $region37: #{tpu_custom_call.1} parent=5 // pred_check
      %p352 = pneg %p351
    $region38: #{tpu_custom_call.1} parent=5 // pred_check_branch
      %354 = sbr.rel (%p352) target = $region40
    $region39: #{tpu_custom_call.1} parent=5 // pred_region
      %s355 = ssub.s32 %s9, 2
      // Predicated region
      $region41: #{tpu_custom_call.1} parent=39 // pred_check
        %p356 = pneg %p106
      $region42: #{tpu_custom_call.1} parent=39 // pred_check_branch
        %358 = sbr.rel (%p356) target = $region44
      $region43: #{tpu_custom_call.1} parent=39 // pred_region
        %s359 = smul.u32 8, %s15
        %p360 = scmp.lt.s32.totalorder %s359, 15
        %s361 = scalar_select %p360, %s359, 15
        %s362 = smul.addr %s361, 4
        %s363 = scalar_lea.vmem %s3, %s362
      $region44: #{tpu_custom_call.1} parent=39 // pred_fallthru
        _
    $region40: #{tpu_custom_call.1} parent=5 // pred_fallthru
      _
  $region6: #{tpu_custom_call.1} parent=0 // loop_footer
    %s13 = sadd.s32 1, %s9
  $region7: #{tpu_custom_call.1} parent=0 // loop_footer_branch
    %8 = sbr.rel target = $region3
  $region8: #{tpu_custom_call.1} parent=0 // loop_exit
    _

</llo_original>
